<compile_context>
chip_gen: v6e
topology: v6e:2x2x1
jax: 0.10.0
libtpu: 0.0.40
codegen_flags: <defaults>
</compile_context>

<pallas_src>
import functools

import jax
import jax.numpy as jnp
from jax.experimental import pallas as pl
from jax.experimental.pallas import tpu as pltpu

_VMEM_LIMIT_BYTES = 32 * 1024 * 1024  # ample for 512x512 tiles, safe on v5e/v6e/v7x


# ----------------------------------------------------------------------------
# Kernels
# ----------------------------------------------------------------------------
def _emw_kernel(xm_ref, wm_ref, bm_ref, w_ref, out_ref):
    """EmW[i] = ReLU(x_m[i] @ wm + bm) @ W   (miRNA encoder + left bilinear)."""
    em = jnp.dot(xm_ref[...], wm_ref[...], preferred_element_type=jnp.float32)
    em = jnp.maximum(em + bm_ref[...], 0.0).astype(jnp.bfloat16)
    emw = jnp.dot(em, w_ref[...], preferred_element_type=jnp.float32)
    out_ref[...] = emw.astype(out_ref.dtype)


def _edT_kernel(wdT_ref, xdT_ref, bd_ref, out_ref):
    """EdT[:, j] = ReLU(wd^T @ x_d^T[:, j] + bd)   (disease encoder, transposed)."""
    ed = jnp.dot(wdT_ref[...], xdT_ref[...], preferred_element_type=jnp.float32)
    ed = jnp.maximum(ed + bd_ref[...], 0.0)
    out_ref[...] = ed.astype(out_ref.dtype)


def _decoder_kernel(emw_ref, edt_ref, out_ref):
    """out[i, j] = sigmoid(EmW[i] @ EdT[:, j])  — one MXU matmul per step."""
    scores = jnp.dot(emw_ref[...], edt_ref[...],
                     preferred_element_type=jnp.float32)
    # sigmoid(x) = 1 / (1 + exp(-x)); exp and the (approx) reciprocal both run
    # on the EUP slot, keeping the VPU free.  Clamp to avoid exp overflow.
    z = jnp.exp(jnp.minimum(-scores, 80.0))
    out_ref[...] = pl.reciprocal(1.0 + z, approx=True).astype(out_ref.dtype)


# ----------------------------------------------------------------------------
# Host-side helpers
# ----------------------------------------------------------------------------
def _round_up(x, m):
    return (x + m - 1) // m * m


def _pad2(a, rows, cols):
    return jnp.pad(a, ((0, rows - a.shape[0]), (0, cols - a.shape[1])))


def prepare_mhgnimc_params(wm, bm, wd, bd, w):
    """Pad + cast the (fixed) weights once at init time."""
    F, H = wm.shape
    F_p = _round_up(F, 128)
    H_p = _round_up(H, 128)
    return {
        "wm": _pad2(wm, F_p, H_p).astype(jnp.bfloat16),          # [F_p, H_p]
        "bm": _pad2(bm.reshape(1, -1), 1, H_p).astype(jnp.float32),   # [1, H_p]
        "wdT": _pad2(wd.T, H_p, F_p).astype(jnp.bfloat16),        # [H_p, F_p]
        "bd": _pad2(bd.reshape(-1, 1), H_p, 1).astype(jnp.float32),   # [H_p, 1]
        "w": _pad2(w, H_p, H_p).astype(jnp.bfloat16),             # [H_p, H_p]
    }


@functools.partial(jax.jit, static_argnames=("tm", "tn", "out_dtype"))
def mhgnimc_forward(x_m, x_d, params, *, tm=512, tn=512,
                    out_dtype=jnp.bfloat16):
    Nm, F = x_m.shape
    Nd = x_d.shape[0]
    wm_p, bm_p = params["wm"], params["bm"]
    wdT_p, bd_p = params["wdT"], params["bd"]
    w_p = params["w"]
    F_p, H_p = wm_p.shape

    # --- tile sizes (row tiles multiple of 16 for bf16 sublanes, col tiles
    #     multiple of 128 for lane-dense stores) ------------------------------
    tm = _round_up(tm, 16)
    tn = _round_up(tn, 128)
    tm_eff = min(tm, _round_up(Nm, 16))
    tn_eff = min(tn, _round_up(Nd, 128))
    Nm_p = _round_up(Nm, tm_eff)
    Nd_p = _round_up(Nd, tn_eff)
    # Give megacore at least 2 row tiles to shard when the problem allows it.
    if Nm_p // tm_eff == 1 and Nm >= 32:
        tm_eff = _round_up((Nm + 1) // 2, 16)
        Nm_p = _round_up(Nm, tm_eff)

    # --- per-call activation padding / bf16 cast -----------------------------
    x_m_p = _pad2(x_m, Nm_p, F_p).astype(jnp.bfloat16)          # [Nm_p, F_p]
    x_dT_p = _pad2(x_d.T, F_p, Nd_p).astype(jnp.bfloat16)       # [F_p, Nd_p]

    cparams_1d = pltpu.CompilerParams(
        dimension_semantics=("parallel",),
        vmem_limit_bytes=_VMEM_LIMIT_BYTES)

    # --- prologue 1: EmW = ReLU(x_m @ wm + bm) @ W  -> [Nm_p, H_p] bf16 ------
    emw = pl.pallas_call(
        _emw_kernel,
        out_shape=jax.ShapeDtypeStruct((Nm_p, H_p), jnp.bfloat16),
        grid_spec=pltpu.PrefetchScalarGridSpec(
            num_scalar_prefetch=0,
            grid=(Nm_p // tm_eff,),
            in_specs=[
                pl.BlockSpec((tm_eff, F_p), lambda i: (i, 0)),
                pl.BlockSpec((F_p, H_p), lambda i: (0, 0)),
                pl.BlockSpec((1, H_p), lambda i: (0, 0)),
                pl.BlockSpec((H_p, H_p), lambda i: (0, 0)),
            ],
            out_specs=pl.BlockSpec((tm_eff, H_p), lambda i: (i, 0)),
        ),
        compiler_params=cparams_1d,
    )(x_m_p, wm_p, bm_p, w_p)

    # --- prologue 2: EdT = ReLU(wd^T @ x_d^T + bd)  -> [H_p, Nd_p] bf16 ------
    edt = pl.pallas_call(
        _edT_kernel,
        out_shape=jax.ShapeDtypeStruct((H_p, Nd_p), jnp.bfloat16),
        grid_spec=pltpu.PrefetchScalarGridSpec(
            num_scalar_prefetch=0,
            grid=(Nd_p // tn_eff,),
            in_specs=[
                pl.BlockSpec((H_p, F_p), lambda j: (0, 0)),
                pl.BlockSpec((F_p, tn_eff), lambda j: (0, j)),
                pl.BlockSpec((H_p, 1), lambda j: (0, 0)),
            ],
            out_specs=pl.BlockSpec((H_p, tn_eff), lambda j: (0, j)),
        ),
        compiler_params=cparams_1d,
    )(wdT_p, x_dT_p, bd_p)

    # --- decoder: sigmoid(EmW @ EdT), tiled 2-D grid, both axes parallel -----
    out_itemsize = jnp.dtype(out_dtype).itemsize
    cost = pl.CostEstimate(
        flops=2 * Nm_p * Nd_p * H_p,
        transcendentals=Nm_p * Nd_p,
        bytes_accessed=(Nm_p * H_p * 2 + H_p * Nd_p * 2
                        + Nm_p * Nd_p * out_itemsize))

    out_p = pl.pallas_call(
        _decoder_kernel,
        out_shape=jax.ShapeDtypeStruct((Nm_p, Nd_p), out_dtype),
        grid_spec=pltpu.PrefetchScalarGridSpec(
            num_scalar_prefetch=0,
            grid=(Nm_p // tm_eff, Nd_p // tn_eff),
            in_specs=[
                pl.BlockSpec((tm_eff, H_p), lambda i, j: (i, 0)),
                pl.BlockSpec((H_p, tn_eff), lambda i, j: (0, j)),
            ],
            out_specs=pl.BlockSpec((tm_eff, tn_eff), lambda i, j: (i, j)),
        ),
        compiler_params=pltpu.CompilerParams(
            dimension_semantics=("parallel", "parallel"),
            vmem_limit_bytes=_VMEM_LIMIT_BYTES),
        cost_estimate=cost,
    )(emw, edt)

    if Nm_p == Nm and Nd_p == Nd:
        return out_p
    return out_p[:Nm, :Nd]


def mhgnimc_reference(x_m, x_d, wm, bm, wd, bd, w):
    em = jnp.maximum(x_m @ wm + bm[None, :], 0.0)
    ed = jnp.maximum(x_d @ wd + bd[None, :], 0.0)
    return jax.nn.sigmoid(em @ w @ ed.T)


if __name__ == "__main__":
    # Small synthetic shapes: Nm miRNAs, Nd diseases, F raw features, H hidden.
    Nm, Nd, F, H = 16, 8, 32, 32

    key = jax.random.PRNGKey(0)
    k = jax.random.split(key, 7)
    x_m = jax.random.normal(k[0], (Nm, F), dtype=jnp.float32)
    x_d = jax.random.normal(k[1], (Nd, F), dtype=jnp.float32)
    wm = jax.random.normal(k[2], (F, H), dtype=jnp.float32) * 0.1
    bm = jax.random.normal(k[3], (H,), dtype=jnp.float32) * 0.1
    wd = jax.random.normal(k[4], (F, H), dtype=jnp.float32) * 0.1
    bd = jax.random.normal(k[5], (H,), dtype=jnp.float32) * 0.1
    w = jax.random.normal(k[6], (H, H), dtype=jnp.float32) * 0.1

    params = prepare_mhgnimc_params(wm, bm, wd, bd, w)   # one-time init cost
    out = mhgnimc_forward(x_m, x_d, params)
    out = jax.block_until_ready(out)

    ref = mhgnimc_reference(x_m, x_d, wm, bm, wd, bd, w)
    assert out.shape == (Nm, Nd)
    # bf16 MXU operands + bf16 output + approx reciprocal -> loosened tolerance.
    err = jnp.max(jnp.abs(out.astype(jnp.float32) - ref))
    assert jnp.allclose(out.astype(jnp.float32), ref, atol=2e-2,
                        rtol=0.0), float(err)
    print("KERNEL_OK")
</pallas_src>

<mosaic_0001>
module attributes {stable_mosaic.version = 11 : i64} {
  func.func @_edT_kernel(%arg0: i32, %arg1: memref<128x128xbf16, #tpu.memory_space<vmem>>, %arg2: memref<128x128xbf16, #tpu.memory_space<vmem>>, %arg3: memref<128x1xf32, #tpu.memory_space<vmem>>, %arg4: memref<128x128xbf16, #tpu.memory_space<vmem>>) attributes {dimension_semantics = [#tpu.dimension_semantics<parallel>], iteration_bounds = array<i64: 1>, scalar_prefetch = 0 : i64, scratch_operands = 0 : i64, tpu.core_type = #tpu.core_type<tc>, window_params = [{pipeline_mode = #tpu.pipeline_mode<synchronous>, transform_indices = @transform_0, window_bounds = array<i64: 128, 128>}, {transform_indices = @transform_1, window_bounds = array<i64: 128, 128>}, {pipeline_mode = #tpu.pipeline_mode<synchronous>, transform_indices = @transform_2, window_bounds = array<i64: 128, 1>}, {transform_indices = @transform_3, window_bounds = array<i64: 128, 128>}]} {
    %c0 = arith.constant 0 : index
    %c0_0 = arith.constant 0 : index
    %0 = vector.load %arg1[%c0, %c0_0] : memref<128x128xbf16, #tpu.memory_space<vmem>>, vector<128x128xbf16>
    %c0_1 = arith.constant 0 : index
    %c0_2 = arith.constant 0 : index
    %1 = vector.load %arg2[%c0_1, %c0_2] : memref<128x128xbf16, #tpu.memory_space<vmem>>, vector<128x128xbf16>
    %cst = arith.constant dense<0.000000e+00> : vector<128x128xf32>
    %2 = tpu.matmul %0, %1, %cst {dimension_numbers = #tpu.dot_dimension_numbers<[1], [0], [0], [1], [0, 0, 1, 1], [], []>} : vector<128x128xbf16>, vector<128x128xbf16>, vector<128x128xf32> -> vector<128x128xf32>
    %c0_3 = arith.constant 0 : index
    %c0_4 = arith.constant 0 : index
    %3 = vector.load %arg3[%c0_3, %c0_4] : memref<128x1xf32, #tpu.memory_space<vmem>>, vector<128x1xf32>
    %4 = vector.broadcast %3 : vector<128x1xf32> to vector<128x128xf32>
    %5 = arith.addf %2, %4 : vector<128x128xf32>
    %cst_5 = arith.constant 0.000000e+00 : f32
    %6 = vector.broadcast %cst_5 : f32 to vector<128x128xf32>
    %7 = arith.maximumf %5, %6 : vector<128x128xf32>
    %8 = arith.truncf %7 : vector<128x128xf32> to vector<128x128xbf16>
    %c0_6 = arith.constant 0 : index
    %c0_7 = arith.constant 0 : index
    %9 = vector.load %arg4[%c0_6, %c0_7] : memref<128x128xbf16, #tpu.memory_space<vmem>>, vector<128x128xbf16>
    tpu.vector_store %arg4[%c0_6, %c0_7], %8 {strides = array<i32>} : memref<128x128xbf16, #tpu.memory_space<vmem>>, vector<128x128xbf16>,
    return
  }
  func.func @transform_0(%arg0: i32) -> (i32, i32) {
    %c0_i32 = arith.constant 0 : i32
    %c0_i32_0 = arith.constant 0 : i32
    %c0_i32_1 = arith.constant 0 : i32
    return %c0_i32, %c0_i32_0 : i32, i32
  }
  func.func @transform_1(%arg0: i32) -> (i32, i32) {
    %c0_i32 = arith.constant 0 : i32
    %c0_i32_0 = arith.constant 0 : i32
    return %c0_i32, %arg0 : i32, i32
  }
  func.func @transform_2(%arg0: i32) -> (i32, i32) {
    %c0_i32 = arith.constant 0 : i32
    %c0_i32_0 = arith.constant 0 : i32
    %c0_i32_1 = arith.constant 0 : i32
    return %c0_i32, %c0_i32_0 : i32, i32
  }
  func.func @transform_3(%arg0: i32) -> (i32, i32) {
    %c0_i32 = arith.constant 0 : i32
    %c0_i32_0 = arith.constant 0 : i32
    return %c0_i32, %arg0 : i32, i32
  }
}

module attributes {stable_mosaic.version = 11 : i64} {
  func.func @_emw_kernel(%arg0: i32, %arg1: memref<16x128xbf16, #tpu.memory_space<vmem>>, %arg2: memref<128x128xbf16, #tpu.memory_space<vmem>>, %arg3: memref<1x128xf32, #tpu.memory_space<vmem>>, %arg4: memref<128x128xbf16, #tpu.memory_space<vmem>>, %arg5: memref<16x128xbf16, #tpu.memory_space<vmem>>) attributes {dimension_semantics = [#tpu.dimension_semantics<parallel>], iteration_bounds = array<i64: 1>, scalar_prefetch = 0 : i64, scratch_operands = 0 : i64, tpu.core_type = #tpu.core_type<tc>, window_params = [{transform_indices = @transform_0, window_bounds = array<i64: 16, 128>}, {pipeline_mode = #tpu.pipeline_mode<synchronous>, transform_indices = @transform_1, window_bounds = array<i64: 128, 128>}, {pipeline_mode = #tpu.pipeline_mode<synchronous>, transform_indices = @transform_2, window_bounds = array<i64: 1, 128>}, {pipeline_mode = #tpu.pipeline_mode<synchronous>, transform_indices = @transform_3, window_bounds = array<i64: 128, 128>}, {transform_indices = @transform_4, window_bounds = array<i64: 16, 128>}]} {
    %c0 = arith.constant 0 : index
    %c0_0 = arith.constant 0 : index
    %0 = vector.load %arg1[%c0, %c0_0] : memref<16x128xbf16, #tpu.memory_space<vmem>>, vector<16x128xbf16>
    %c0_1 = arith.constant 0 : index
    %c0_2 = arith.constant 0 : index
    %1 = vector.load %arg2[%c0_1, %c0_2] : memref<128x128xbf16, #tpu.memory_space<vmem>>, vector<128x128xbf16>
    %cst = arith.constant dense<0.000000e+00> : vector<16x128xf32>
    %2 = tpu.matmul %0, %1, %cst {dimension_numbers = #tpu.dot_dimension_numbers<[1], [0], [0], [1], [0, 0, 1, 1], [], []>} : vector<16x128xbf16>, vector<128x128xbf16>, vector<16x128xf32> -> vector<16x128xf32>
    %c0_3 = arith.constant 0 : index
    %c0_4 = arith.constant 0 : index
    %3 = vector.load %arg3[%c0_3, %c0_4] : memref<1x128xf32, #tpu.memory_space<vmem>>, vector<1x128xf32>
    %4 = vector.broadcast %3 : vector<1x128xf32> to vector<16x128xf32>
    %5 = arith.addf %2, %4 : vector<16x128xf32>
    %cst_5 = arith.constant 0.000000e+00 : f32
    %6 = vector.broadcast %cst_5 : f32 to vector<16x128xf32>
    %7 = arith.maximumf %5, %6 : vector<16x128xf32>
    %8 = arith.truncf %7 : vector<16x128xf32> to vector<16x128xbf16>
    %c0_6 = arith.constant 0 : index
    %c0_7 = arith.constant 0 : index
    %9 = vector.load %arg4[%c0_6, %c0_7] : memref<128x128xbf16, #tpu.memory_space<vmem>>, vector<128x128xbf16>
    %cst_8 = arith.constant dense<0.000000e+00> : vector<16x128xf32>
    %10 = tpu.matmul %8, %9, %cst_8 {dimension_numbers = #tpu.dot_dimension_numbers<[1], [0], [0], [1], [0, 0, 1, 1], [], []>} : vector<16x128xbf16>, vector<128x128xbf16>, vector<16x128xf32> -> vector<16x128xf32>
    %11 = arith.truncf %10 : vector<16x128xf32> to vector<16x128xbf16>
    %c0_9 = arith.constant 0 : index
    %c0_10 = arith.constant 0 : index
    %12 = vector.load %arg5[%c0_9, %c0_10] : memref<16x128xbf16, #tpu.memory_space<vmem>>, vector<16x128xbf16>
    tpu.vector_store %arg5[%c0_9, %c0_10], %11 {strides = array<i32>} : memref<16x128xbf16, #tpu.memory_space<vmem>>, vector<16x128xbf16>,
    return
  }
  func.func @transform_0(%arg0: i32) -> (i32, i32) {
    %c0_i32 = arith.constant 0 : i32
    %c0_i32_0 = arith.constant 0 : i32
    return %arg0, %c0_i32 : i32, i32
  }
  func.func @transform_1(%arg0: i32) -> (i32, i32) {
    %c0_i32 = arith.constant 0 : i32
    %c0_i32_0 = arith.constant 0 : i32
    %c0_i32_1 = arith.constant 0 : i32
    return %c0_i32, %c0_i32_0 : i32, i32
  }
  func.func @transform_2(%arg0: i32) -> (i32, i32) {
    %c0_i32 = arith.constant 0 : i32
    %c0_i32_0 = arith.constant 0 : i32
    %c0_i32_1 = arith.constant 0 : i32
    return %c0_i32, %c0_i32_0 : i32, i32
  }
  func.func @transform_3(%arg0: i32) -> (i32, i32) {
    %c0_i32 = arith.constant 0 : i32
    %c0_i32_0 = arith.constant 0 : i32
    %c0_i32_1 = arith.constant 0 : i32
    return %c0_i32, %c0_i32_0 : i32, i32
  }
  func.func @transform_4(%arg0: i32) -> (i32, i32) {
    %c0_i32 = arith.constant 0 : i32
    %c0_i32_0 = arith.constant 0 : i32
    return %arg0, %c0_i32 : i32, i32
  }
}

module attributes {stable_mosaic.version = 11 : i64} {
  func.func @_decoder_kernel(%arg0: i32, %arg1: i32, %arg2: memref<16x128xbf16, #tpu.memory_space<vmem>>, %arg3: memref<128x128xbf16, #tpu.memory_space<vmem>>, %arg4: memref<16x128xbf16, #tpu.memory_space<vmem>>) attributes {dimension_semantics = [#tpu.dimension_semantics<parallel>, #tpu.dimension_semantics<parallel>], iteration_bounds = array<i64: 1, 1>, scalar_prefetch = 0 : i64, scratch_operands = 0 : i64, tpu.core_type = #tpu.core_type<tc>, window_params = [{transform_indices = @transform_0, window_bounds = array<i64: 16, 128>}, {transform_indices = @transform_1, window_bounds = array<i64: 128, 128>}, {transform_indices = @transform_2, window_bounds = array<i64: 16, 128>}]} {
    %c0 = arith.constant 0 : index
    %c0_0 = arith.constant 0 : index
    %0 = vector.load %arg2[%c0, %c0_0] : memref<16x128xbf16, #tpu.memory_space<vmem>>, vector<16x128xbf16>
    %c0_1 = arith.constant 0 : index
    %c0_2 = arith.constant 0 : index
    %1 = vector.load %arg3[%c0_1, %c0_2] : memref<128x128xbf16, #tpu.memory_space<vmem>>, vector<128x128xbf16>
    %cst = arith.constant dense<0.000000e+00> : vector<16x128xf32>
    %2 = tpu.matmul %0, %1, %cst {dimension_numbers = #tpu.dot_dimension_numbers<[1], [0], [0], [1], [0, 0, 1, 1], [], []>} : vector<16x128xbf16>, vector<128x128xbf16>, vector<16x128xf32> -> vector<16x128xf32>
    %cst_3 = arith.constant 0.000000e+00 : f32
    %3 = vector.broadcast %cst_3 : f32 to vector<16x128xf32>
    %4 = arith.subf %3, %2 : vector<16x128xf32>
    %cst_4 = arith.constant 8.000000e+01 : f32
    %5 = vector.broadcast %cst_4 : f32 to vector<16x128xf32>
    %6 = arith.minimumf %4, %5 : vector<16x128xf32>
    %7 = math.exp %6 : vector<16x128xf32>
    %cst_5 = arith.constant 1.000000e+00 : f32
    %8 = vector.broadcast %cst_5 : f32 to vector<16x128xf32>
    %9 = arith.addf %8, %7 : vector<16x128xf32>
    %10 = tpu.reciprocal %9 {approx = true} : vector<16x128xf32> -> vector<16x128xf32>
    %11 = arith.truncf %10 : vector<16x128xf32> to vector<16x128xbf16>
    %c0_6 = arith.constant 0 : index
    %c0_7 = arith.constant 0 : index
    %12 = vector.load %arg4[%c0_6, %c0_7] : memref<16x128xbf16, #tpu.memory_space<vmem>>, vector<16x128xbf16>
    tpu.vector_store %arg4[%c0_6, %c0_7], %11 {strides = array<i32>} : memref<16x128xbf16, #tpu.memory_space<vmem>>, vector<16x128xbf16>,
    return
  }
  func.func @transform_0(%arg0: i32, %arg1: i32) -> (i32, i32) {
    %c0_i32 = arith.constant 0 : i32
    %c0_i32_0 = arith.constant 0 : i32
    return %arg0, %c0_i32 : i32, i32
  }
  func.func @transform_1(%arg0: i32, %arg1: i32) -> (i32, i32) {
    %c0_i32 = arith.constant 0 : i32
    %c0_i32_0 = arith.constant 0 : i32
    return %c0_i32, %arg1 : i32, i32
  }
  func.func @transform_2(%arg0: i32, %arg1: i32) -> (i32, i32) {
    %c0_i32 = arith.constant 0 : i32
    return %arg0, %arg1 : i32, i32
  }
}

</mosaic_0001>

<llo_original>
// kernel: mhgnimc_forward.5
$region0: #{mhgnimc_forward.5}
  #allocation0 [shape = 'u32[]', space=smem, size = 0x4, offset = 0x4, fixed_abs, tag = 'smem constant byte address 0x4 - core index']
  #allocation1 [shape = 'u32[144,128]{1,0:T(1,128)}', space=vmem, size = 0x12000, scoped, tag = 'internal scratch']
  %s0 = inlined_call_operand.vmem [shape: bf16[16,128], index: 0, kind: input, shape index: {}]
  %s1 = inlined_call_operand.vmem [shape: bf16[128,128], index: 1, kind: input, shape index: {}]
  %s2 = inlined_call_operand.vmem [shape: bf16[16,128], index: 2, kind: output, shape index: {}]
  %s3 = sld [smem:[#allocation0]]
  $region18: #{mhgnimc_forward.5} parent=0
    _
  %s5 = ssub.s32 1, %s3
  %s6 = scalar_select 0, %s5, %s3
  // Predicated region
  $region2: #{mhgnimc_forward.5} parent=0 // pred_check
    _
  $region3: #{mhgnimc_forward.5} parent=0 // pred_check_branch
    %8 = sbr.rel (0) target = $region5
  $region4: #{mhgnimc_forward.5} parent=0 // pred_region
    _
  $region5: #{mhgnimc_forward.5} parent=0 // pred_fallthru
    _
  // Predicated region
  $region6: #{mhgnimc_forward.5} parent=0 // pred_check
    _
  $region7: #{mhgnimc_forward.5} parent=0 // pred_check_branch
    %10 = sbr.rel (0) target = $region9
  $region8: #{mhgnimc_forward.5} parent=0 // pred_region
    _
  $region9: #{mhgnimc_forward.5} parent=0 // pred_fallthru
    _
  %v12 = vld [vmem:[%s0] sm:$0xf]
  %v13 = vld [vmem:[%s0 + $0x4] sm:$0xf]
  %v14 = vld [vmem:[%s1] sm:$0xf]
  %v15 = vld [vmem:[%s1 + $0x4] sm:$0xf]
  %v16 = vld [vmem:[%s1 + $0x8] sm:$0xf]
  %v17 = vld [vmem:[%s1 + $0xc] sm:$0xf]
  %v18 = vld [vmem:[%s1 + $0x10] sm:$0xf]
  %v19 = vld [vmem:[%s1 + $0x14] sm:$0xf]
  %v20 = vld [vmem:[%s1 + $0x18] sm:$0xf]
  %v21 = vld [vmem:[%s1 + $0x1c] sm:$0xf]
  %v22 = vld [vmem:[%s1 + $0x20] sm:$0xf]
  %v23 = vld [vmem:[%s1 + $0x24] sm:$0xf]
  %v24 = vld [vmem:[%s1 + $0x28] sm:$0xf]
  %v25 = vld [vmem:[%s1 + $0x2c] sm:$0xf]
  %v26 = vld [vmem:[%s1 + $0x30] sm:$0xf]
  %v27 = vld [vmem:[%s1 + $0x34] sm:$0xf]
  %v28 = vld [vmem:[%s1 + $0x38] sm:$0xf]
  %v29 = vld [vmem:[%s1 + $0x3c] sm:$0xf]
  %v32 = vunpack.c.l.b16 %v12
  %v33 = vunpack.c.l.b16 %v13
  %v34 = vpack.c.b16 %v33, %v32
  %v52 = vunpack.c.l.b16 %v14
  %v53 = vunpack.c.l.b16 %v15
  %v54 = vunpack.c.l.b16 %v16
  %v55 = vunpack.c.l.b16 %v17
  %v56 = vunpack.c.l.b16 %v18
  %v57 = vunpack.c.l.b16 %v19
  %v58 = vunpack.c.l.b16 %v20
  %v59 = vunpack.c.l.b16 %v21
  %v60 = vunpack.c.l.b16 %v22
  %v61 = vunpack.c.l.b16 %v23
  %v62 = vunpack.c.l.b16 %v24
  %v63 = vunpack.c.l.b16 %v25
  %v64 = vunpack.c.l.b16 %v26
  %v65 = vunpack.c.l.b16 %v27
  %v66 = vunpack.c.l.b16 %v28
  %v67 = vunpack.c.l.b16 %v29
  %v68 = vpack.c.b16 %v53, %v52
  %v69 = vpack.c.b16 %v55, %v54
  %v70 = vpack.c.b16 %v57, %v56
  %v71 = vpack.c.b16 %v59, %v58
  %v72 = vpack.c.b16 %v61, %v60
  %v73 = vpack.c.b16 %v63, %v62
  %v74 = vpack.c.b16 %v65, %v64
  %v75 = vpack.c.b16 %v67, %v66
  %84 = vmatprep.subr.bf16.mxu0 0
  %85 = vmatpush1.bf16.msra.mxu0 %v75
  %86 = vmatprep.subr.bf16.mxu0 0
  %87 = vmatpush1.bf16.msra.mxu0 %v74
  %88 = vmatprep.subr.bf16.mxu0 0
  %89 = vmatpush1.bf16.msra.mxu0 %v73
  %90 = vmatprep.subr.bf16.mxu0 0
  %91 = vmatpush1.bf16.msra.mxu0 %v72
  %92 = vmatprep.subr.bf16.mxu0 0
  %93 = vmatpush1.bf16.msra.mxu0 %v71
  %94 = vmatprep.subr.bf16.mxu0 0
  %95 = vmatpush1.bf16.msra.mxu0 %v70
  %96 = vmatprep.subr.bf16.mxu0 0
  %97 = vmatpush1.bf16.msra.mxu0 %v69
  %98 = vmatprep.subr.bf16.mxu0 0
  %99 = vmatpush1.bf16.msra.mxu0 %v68
  %100 = vmatprep.subr.bf16.mxu0 0
  %101 = vmatpush2.bf16.msra.mxu0 0
  %102 = vmatprep.subr.bf16.mxu0 0
  %103 = vmatpush2.bf16.msra.mxu0 0
  %104 = vmatprep.subr.bf16.mxu0 0
  %105 = vmatpush2.bf16.msra.mxu0 0
  %106 = vmatprep.subr.bf16.mxu0 0
  %107 = vmatpush2.bf16.msra.mxu0 0
  %108 = vmatprep.subr.bf16.mxu0 0
  %109 = vmatpush2.bf16.msra.mxu0 0
  %110 = vmatprep.subr.bf16.mxu0 0
  %111 = vmatpush2.bf16.msra.mxu0 0
  %112 = vmatprep.subr.bf16.mxu0 0
  %113 = vmatpush2.bf16.msra.mxu0 0
  %114 = vmatprep.subr.bf16.mxu0 0
  %115 = vmatpush2.bf16.msra.mxu0 0
  %116 = vmatprep.mubr.bf16.mxu0 0
  %117 = vmatmul.mubr.bf16.gmra.mxu0 %v34
  %v118 = vpop.f32.mrf.mxu0
  %v119 = vadd.f32 0.0, %v118
  %v120 = vpop.f32.mrf.mxu0
  %v121 = vpop.f32.mrf.mxu0
  %v122 = vadd.f32 0.0, %v121
  %v123 = vpop.f32.mrf.mxu0
  %124 = vdwg.mxu0
  %v125 = vsub.f32 0.0, %v119
  %v126 = vsub.f32 0.0, %v122
  %v127 = vmin.f32 %v125, 80.0
  %v128 = vmin.f32 %v126, 80.0
  %v129 = vmul.f32 %v127, 1.442695
  %v130 = vpow.pop %v129
  %v131 = vmul.f32 %v128, 1.442695
  %v132 = vpow.pop %v131
  %v133 = vadd.f32 %v130, 1.0
  %v134 = vadd.f32 %v132, 1.0
  %v135 = vrcp.pop %v133
  %v136 = vrcp.pop %v134
  %v137 = vpack.c.bf16 %v136, %v135
  %v139 = vunpack.c.l.b16 %v137
  %v140 = vunpack.c.h.b16 %v137
  %v141 = vpack.c.b16 %v139, %v139
  %v142 = vpack.c.b16 %v140, %v140
  %145 = vst [vmem:[%s2] sm:$0xf] %v141
  %146 = vst [vmem:[%s2 + $0x4] sm:$0xf] %v142
  // Predicated region
  $region10: #{mhgnimc_forward.5} parent=0 // pred_check
    _
  $region11: #{mhgnimc_forward.5} parent=0 // pred_check_branch
    %148 = sbr.rel (0) target = $region13
  $region12: #{mhgnimc_forward.5} parent=0 // pred_region
    _
  $region13: #{mhgnimc_forward.5} parent=0 // pred_fallthru
    _
  // Predicated region
  $region14: #{mhgnimc_forward.5} parent=0 // pred_check
    _
  $region15: #{mhgnimc_forward.5} parent=0 // pred_check_branch
    %150 = sbr.rel (0) target = $region17
  $region16: #{mhgnimc_forward.5} parent=0 // pred_region
    _
  $region17: #{mhgnimc_forward.5} parent=0 // pred_fallthru
    _

// kernel: mhgnimc_forward.3
$region0: #{mhgnimc_forward.3}
  #allocation0 [shape = 'u32[]', space=smem, size = 0x4, offset = 0x4, fixed_abs, tag = 'smem constant byte address 0x4 - core index']
  #allocation1 [shape = 'u32[144,128]{1,0:T(1,128)}', space=vmem, size = 0x12000, scoped, tag = 'internal scratch']
  %s0 = inlined_call_operand.vmem [shape: bf16[16,128], index: 0, kind: input, shape index: {}]
  %s1 = inlined_call_operand.vmem [shape: bf16[128,128], index: 1, kind: input, shape index: {}]
  %s2 = inlined_call_operand.vmem [shape: f32[1,128], index: 2, kind: input, shape index: {}]
  %s3 = inlined_call_operand.vmem [shape: bf16[128,128], index: 3, kind: input, shape index: {}]
  %s4 = inlined_call_operand.vmem [shape: bf16[16,128], index: 4, kind: output, shape index: {}]
  %s5 = sld [smem:[#allocation0]]
  $region26: #{mhgnimc_forward.3} parent=0
    _
  %s7 = ssub.s32 1, %s5
  %s8 = scalar_select 0, %s7, %s5
  // Predicated region
  $region2: #{mhgnimc_forward.3} parent=0 // pred_check
    _
  $region3: #{mhgnimc_forward.3} parent=0 // pred_check_branch
    %10 = sbr.rel (0) target = $region5
  $region4: #{mhgnimc_forward.3} parent=0 // pred_region
    _
  $region5: #{mhgnimc_forward.3} parent=0 // pred_fallthru
    _
  // Predicated region
  $region6: #{mhgnimc_forward.3} parent=0 // pred_check
    _
  $region7: #{mhgnimc_forward.3} parent=0 // pred_check_branch
    %12 = sbr.rel (0) target = $region9
  $region8: #{mhgnimc_forward.3} parent=0 // pred_region
    _
  $region9: #{mhgnimc_forward.3} parent=0 // pred_fallthru
    _
  // Predicated region
  $region10: #{mhgnimc_forward.3} parent=0 // pred_check
    _
  $region11: #{mhgnimc_forward.3} parent=0 // pred_check_branch
    %14 = sbr.rel (0) target = $region13
  $region12: #{mhgnimc_forward.3} parent=0 // pred_region
    _
  $region13: #{mhgnimc_forward.3} parent=0 // pred_fallthru
    _
  // Predicated region
  $region14: #{mhgnimc_forward.3} parent=0 // pred_check
    _
  $region15: #{mhgnimc_forward.3} parent=0 // pred_check_branch
    %16 = sbr.rel (0) target = $region17
  $region16: #{mhgnimc_forward.3} parent=0 // pred_region
    _
  $region17: #{mhgnimc_forward.3} parent=0 // pred_fallthru
    _
  %v18 = vld [vmem:[%s0] sm:$0xf]
  %v19 = vld [vmem:[%s0 + $0x4] sm:$0xf]
  %v20 = vld [vmem:[%s1] sm:$0xf]
  %v21 = vld [vmem:[%s1 + $0x4] sm:$0xf]
  %v22 = vld [vmem:[%s1 + $0x8] sm:$0xf]
  %v23 = vld [vmem:[%s1 + $0xc] sm:$0xf]
  %v24 = vld [vmem:[%s1 + $0x10] sm:$0xf]
  %v25 = vld [vmem:[%s1 + $0x14] sm:$0xf]
  %v26 = vld [vmem:[%s1 + $0x18] sm:$0xf]
  %v27 = vld [vmem:[%s1 + $0x1c] sm:$0xf]
  %v28 = vld [vmem:[%s1 + $0x20] sm:$0xf]
  %v29 = vld [vmem:[%s1 + $0x24] sm:$0xf]
  %v30 = vld [vmem:[%s1 + $0x28] sm:$0xf]
  %v31 = vld [vmem:[%s1 + $0x2c] sm:$0xf]
  %v32 = vld [vmem:[%s1 + $0x30] sm:$0xf]
  %v33 = vld [vmem:[%s1 + $0x34] sm:$0xf]
  %v34 = vld [vmem:[%s1 + $0x38] sm:$0xf]
  %v35 = vld [vmem:[%s1 + $0x3c] sm:$0xf]
  %v36 = vld [vmem:[%s2] sm:$0x1]
  %v38 = vlaneseq
  %v39 = vshrl.u32 %v38, 7
  %v40 = vsub.s32 0, %v39
  %v41 = vrot.slane %v36, %v40
  %v45 = vunpack.c.l.b16 %v18
  %v46 = vunpack.c.l.b16 %v19
  %v47 = vpack.c.b16 %v46, %v45
  %v65 = vunpack.c.l.b16 %v20
  %v66 = vunpack.c.l.b16 %v21
  %v67 = vunpack.c.l.b16 %v22
  %v68 = vunpack.c.l.b16 %v23
  %v69 = vunpack.c.l.b16 %v24
  %v70 = vunpack.c.l.b16 %v25
  %v71 = vunpack.c.l.b16 %v26
  %v72 = vunpack.c.l.b16 %v27
  %v73 = vunpack.c.l.b16 %v28
  %v74 = vunpack.c.l.b16 %v29
  %v75 = vunpack.c.l.b16 %v30
  %v76 = vunpack.c.l.b16 %v31
  %v77 = vunpack.c.l.b16 %v32
  %v78 = vunpack.c.l.b16 %v33
  %v79 = vunpack.c.l.b16 %v34
  %v80 = vunpack.c.l.b16 %v35
  %v81 = vpack.c.b16 %v66, %v65
  %v82 = vpack.c.b16 %v68, %v67
  %v83 = vpack.c.b16 %v70, %v69
  %v84 = vpack.c.b16 %v72, %v71
  %v85 = vpack.c.b16 %v74, %v73
  %v86 = vpack.c.b16 %v76, %v75
  %v87 = vpack.c.b16 %v78, %v77
  %v88 = vpack.c.b16 %v80, %v79
  %97 = vmatprep.subr.bf16.mxu0 0
  %98 = vmatpush1.bf16.msra.mxu0 %v88
  %99 = vmatprep.subr.bf16.mxu0 0
  %100 = vmatpush1.bf16.msra.mxu0 %v87
  %101 = vmatprep.subr.bf16.mxu0 0
  %102 = vmatpush1.bf16.msra.mxu0 %v86
  %103 = vmatprep.subr.bf16.mxu0 0
  %104 = vmatpush1.bf16.msra.mxu0 %v85
  %105 = vmatprep.subr.bf16.mxu0 0
  %106 = vmatpush1.bf16.msra.mxu0 %v84
  %107 = vmatprep.subr.bf16.mxu0 0
  %108 = vmatpush1.bf16.msra.mxu0 %v83
  %109 = vmatprep.subr.bf16.mxu0 0
  %110 = vmatpush1.bf16.msra.mxu0 %v82
  %111 = vmatprep.subr.bf16.mxu0 0
  %112 = vmatpush1.bf16.msra.mxu0 %v81
  %113 = vmatprep.subr.bf16.mxu0 0
  %114 = vmatpush2.bf16.msra.mxu0 0
  %115 = vmatprep.subr.bf16.mxu0 0
  %116 = vmatpush2.bf16.msra.mxu0 0
  %117 = vmatprep.subr.bf16.mxu0 0
  %118 = vmatpush2.bf16.msra.mxu0 0
  %119 = vmatprep.subr.bf16.mxu0 0
  %120 = vmatpush2.bf16.msra.mxu0 0
  %121 = vmatprep.subr.bf16.mxu0 0
  %122 = vmatpush2.bf16.msra.mxu0 0
  %123 = vmatprep.subr.bf16.mxu0 0
  %124 = vmatpush2.bf16.msra.mxu0 0
  %125 = vmatprep.subr.bf16.mxu0 0
  %126 = vmatpush2.bf16.msra.mxu0 0
  %127 = vmatprep.subr.bf16.mxu0 0
  %128 = vmatpush2.bf16.msra.mxu0 0
  %129 = vmatprep.mubr.bf16.mxu0 0
  %130 = vmatmul.mubr.bf16.gmra.mxu0 %v47
  %v131 = vpop.f32.mrf.mxu0
  %v132 = vadd.f32 %v41, %v131
  %v133 = vpop.f32.mrf.mxu0
  %v134 = vpop.f32.mrf.mxu0
  %v135 = vadd.f32 %v41, %v134
  %v136 = vpop.f32.mrf.mxu0
  %137 = vdwg.mxu0
  %v138 = vmax.f32 %v132, 0.0
  %v139 = vmax.f32 %v135, 0.0
  %v140 = vpack.c.bf16 %v139, %v138
  %v141 = vld [vmem:[%s3] sm:$0xf]
  %v142 = vld [vmem:[%s3 + $0x4] sm:$0xf]
  %v143 = vld [vmem:[%s3 + $0x8] sm:$0xf]
  %v144 = vld [vmem:[%s3 + $0xc] sm:$0xf]
  %v145 = vld [vmem:[%s3 + $0x10] sm:$0xf]
  %v146 = vld [vmem:[%s3 + $0x14] sm:$0xf]
  %v147 = vld [vmem:[%s3 + $0x18] sm:$0xf]
  %v148 = vld [vmem:[%s3 + $0x1c] sm:$0xf]
  %v149 = vld [vmem:[%s3 + $0x20] sm:$0xf]
  %v150 = vld [vmem:[%s3 + $0x24] sm:$0xf]
  %v151 = vld [vmem:[%s3 + $0x28] sm:$0xf]
  %v152 = vld [vmem:[%s3 + $0x2c] sm:$0xf]
  %v153 = vld [vmem:[%s3 + $0x30] sm:$0xf]
  %v154 = vld [vmem:[%s3 + $0x34] sm:$0xf]
  %v155 = vld [vmem:[%s3 + $0x38] sm:$0xf]
  %v156 = vld [vmem:[%s3 + $0x3c] sm:$0xf]
  %v173 = vunpack.c.l.b16 %v141
  %v174 = vunpack.c.l.b16 %v142
  %v175 = vunpack.c.l.b16 %v143
  %v176 = vunpack.c.l.b16 %v144
  %v177 = vunpack.c.l.b16 %v145
  %v178 = vunpack.c.l.b16 %v146
  %v179 = vunpack.c.l.b16 %v147
  %v180 = vunpack.c.l.b16 %v148
  %v181 = vunpack.c.l.b16 %v149
  %v182 = vunpack.c.l.b16 %v150
  %v183 = vunpack.c.l.b16 %v151
  %v184 = vunpack.c.l.b16 %v152
  %v185 = vunpack.c.l.b16 %v153
  %v186 = vunpack.c.l.b16 %v154
  %v187 = vunpack.c.l.b16 %v155
  %v188 = vunpack.c.l.b16 %v156
  %v189 = vpack.c.b16 %v174, %v173
  %v190 = vpack.c.b16 %v176, %v175
  %v191 = vpack.c.b16 %v178, %v177
  %v192 = vpack.c.b16 %v180, %v179
  %v193 = vpack.c.b16 %v182, %v181
  %v194 = vpack.c.b16 %v184, %v183
  %v195 = vpack.c.b16 %v186, %v185
  %v196 = vpack.c.b16 %v188, %v187
  %205 = vmatprep.subr.bf16.mxu0 0
  %206 = vmatpush1.bf16.msra.mxu0 %v196
  %207 = vmatprep.subr.bf16.mxu0 0
  %208 = vmatpush1.bf16.msra.mxu0 %v195
  %209 = vmatprep.subr.bf16.mxu0 0
  %210 = vmatpush1.bf16.msra.mxu0 %v194
  %211 = vmatprep.subr.bf16.mxu0 0
  %212 = vmatpush1.bf16.msra.mxu0 %v193
  %213 = vmatprep.subr.bf16.mxu0 0
  %214 = vmatpush1.bf16.msra.mxu0 %v192
  %215 = vmatprep.subr.bf16.mxu0 0
  %216 = vmatpush1.bf16.msra.mxu0 %v191
  %217 = vmatprep.subr.bf16.mxu0 0
  %218 = vmatpush1.bf16.msra.mxu0 %v190
  %219 = vmatprep.subr.bf16.mxu0 0
  %220 = vmatpush1.bf16.msra.mxu0 %v189
  %221 = vmatprep.subr.bf16.mxu0 0
  %222 = vmatpush2.bf16.msra.mxu0 0
  %223 = vmatprep.subr.bf16.mxu0 0
  %224 = vmatpush2.bf16.msra.mxu0 0
  %225 = vmatprep.subr.bf16.mxu0 0
  %226 = vmatpush2.bf16.msra.mxu0 0
  %227 = vmatprep.subr.bf16.mxu0 0
  %228 = vmatpush2.bf16.msra.mxu0 0
  %229 = vmatprep.subr.bf16.mxu0 0
  %230 = vmatpush2.bf16.msra.mxu0 0
  %231 = vmatprep.subr.bf16.mxu0 0
  %232 = vmatpush2.bf16.msra.mxu0 0
  %233 = vmatprep.subr.bf16.mxu0 0
  %234 = vmatpush2.bf16.msra.mxu0 0
  %235 = vmatprep.subr.bf16.mxu0 0
  %236 = vmatpush2.bf16.msra.mxu0 0
  %237 = vmatprep.mubr.bf16.mxu0 0
  %238 = vmatmul.mubr.bf16.gmra.mxu0 %v140
  %v239 = vpop.f32.mrf.mxu0
  %v240 = vadd.f32 0.0, %v239
  %v241 = vpop.f32.mrf.mxu0
  %v242 = vpop.f32.mrf.mxu0
  %v243 = vadd.f32 0.0, %v242
  %v244 = vpop.f32.mrf.mxu0
  %245 = vdwg.mxu0
  %v246 = vpack.c.bf16 %v243, %v240
  %v248 = vunpack.c.l.b16 %v246
  %v249 = vunpack.c.h.b16 %v246
  %v250 = vpack.c.b16 %v248, %v248
  %v251 = vpack.c.b16 %v249, %v249
  %254 = vst [vmem:[%s4] sm:$0xf] %v250
  %255 = vst [vmem:[%s4 + $0x4] sm:$0xf] %v251
  // Predicated region
  $region18: #{mhgnimc_forward.3} parent=0 // pred_check
    _
  $region19: #{mhgnimc_forward.3} parent=0 // pred_check_branch
    %257 = sbr.rel (0) target = $region21
  $region20: #{mhgnimc_forward.3} parent=0 // pred_region
    _
  $region21: #{mhgnimc_forward.3} parent=0 // pred_fallthru
    _
  // Predicated region
  $region22: #{mhgnimc_forward.3} parent=0 // pred_check
    _
  $region23: #{mhgnimc_forward.3} parent=0 // pred_check_branch
    %259 = sbr.rel (0) target = $region25
  $region24: #{mhgnimc_forward.3} parent=0 // pred_region
    _
  $region25: #{mhgnimc_forward.3} parent=0 // pred_fallthru
    _

// kernel: mhgnimc_forward.4
$region0: #{mhgnimc_forward.4}
  #allocation0 [shape = 'u32[]', space=smem, size = 0x4, offset = 0x4, fixed_abs, tag = 'smem constant byte address 0x4 - core index']
  #allocation1 [shape = 'u32[144,128]{1,0:T(1,128)}', space=vmem, size = 0x12000, scoped, tag = 'internal scratch']
  %s0 = inlined_call_operand.vmem [shape: bf16[128,128], index: 0, kind: input, shape index: {}]
  %s1 = inlined_call_operand.vmem [shape: bf16[128,128], index: 1, kind: input, shape index: {}]
  %s2 = inlined_call_operand.vmem [shape: f32[128,1], index: 2, kind: input, shape index: {}]
  %s3 = inlined_call_operand.vmem [shape: bf16[128,128], index: 3, kind: output, shape index: {}]
  %s4 = sld [smem:[#allocation0]]
  $region22: #{mhgnimc_forward.4} parent=0
    _
  %s6 = ssub.s32 1, %s4
  %s7 = scalar_select 0, %s6, %s4
  // Predicated region
  $region2: #{mhgnimc_forward.4} parent=0 // pred_check
    _
  $region3: #{mhgnimc_forward.4} parent=0 // pred_check_branch
    %9 = sbr.rel (0) target = $region5
  $region4: #{mhgnimc_forward.4} parent=0 // pred_region
    _
  $region5: #{mhgnimc_forward.4} parent=0 // pred_fallthru
    _
  // Predicated region
  $region6: #{mhgnimc_forward.4} parent=0 // pred_check
    _
  $region7: #{mhgnimc_forward.4} parent=0 // pred_check_branch
    %11 = sbr.rel (0) target = $region9
  $region8: #{mhgnimc_forward.4} parent=0 // pred_region
    _
  $region9: #{mhgnimc_forward.4} parent=0 // pred_fallthru
    _
  // Predicated region
  $region10: #{mhgnimc_forward.4} parent=0 // pred_check
    _
  $region11: #{mhgnimc_forward.4} parent=0 // pred_check_branch
    %13 = sbr.rel (0) target = $region13
  $region12: #{mhgnimc_forward.4} parent=0 // pred_region
    _
  $region13: #{mhgnimc_forward.4} parent=0 // pred_fallthru
    _
  %v15 = vld [vmem:[%s0] sm:$0xf]
  %v16 = vld [vmem:[%s0 + $0x4] sm:$0xf]
  %v17 = vld [vmem:[%s0 + $0x8] sm:$0xf]
  %v18 = vld [vmem:[%s0 + $0xc] sm:$0xf]
  %v19 = vld [vmem:[%s0 + $0x10] sm:$0xf]
  %v20 = vld [vmem:[%s0 + $0x14] sm:$0xf]
  %v21 = vld [vmem:[%s0 + $0x18] sm:$0xf]
  %v22 = vld [vmem:[%s0 + $0x1c] sm:$0xf]
  %v23 = vld [vmem:[%s0 + $0x20] sm:$0xf]
  %v24 = vld [vmem:[%s0 + $0x24] sm:$0xf]
  %v25 = vld [vmem:[%s0 + $0x28] sm:$0xf]
  %v26 = vld [vmem:[%s0 + $0x2c] sm:$0xf]
  %v27 = vld [vmem:[%s0 + $0x30] sm:$0xf]
  %v28 = vld [vmem:[%s0 + $0x34] sm:$0xf]
  %v29 = vld [vmem:[%s0 + $0x38] sm:$0xf]
  %v30 = vld [vmem:[%s0 + $0x3c] sm:$0xf]
  %v31 = vld [vmem:[%s1] sm:$0xf]
  %v32 = vld [vmem:[%s1 + $0x4] sm:$0xf]
  %v33 = vld [vmem:[%s1 + $0x8] sm:$0xf]
  %v34 = vld [vmem:[%s1 + $0xc] sm:$0xf]
  %v35 = vld [vmem:[%s1 + $0x10] sm:$0xf]
  %v36 = vld [vmem:[%s1 + $0x14] sm:$0xf]
  %v37 = vld [vmem:[%s1 + $0x18] sm:$0xf]
  %v38 = vld [vmem:[%s1 + $0x1c] sm:$0xf]
  %v39 = vld [vmem:[%s1 + $0x20] sm:$0xf]
  %v40 = vld [vmem:[%s1 + $0x24] sm:$0xf]
  %v41 = vld [vmem:[%s1 + $0x28] sm:$0xf]
  %v42 = vld [vmem:[%s1 + $0x2c] sm:$0xf]
  %v43 = vld [vmem:[%s1 + $0x30] sm:$0xf]
  %v44 = vld [vmem:[%s1 + $0x34] sm:$0xf]
  %v45 = vld [vmem:[%s1 + $0x38] sm:$0xf]
  %v46 = vld [vmem:[%s1 + $0x3c] sm:$0xf]
  %v47 = vld [vmem:[%s2] sm:$0xff]
  %v48 = vld [vmem:[%s2 + $0x8] sm:$0xff]
  %v49 = vld [vmem:[%s2 + $0x10] sm:$0xff]
  %v50 = vld [vmem:[%s2 + $0x18] sm:$0xff]
  %v51 = vld [vmem:[%s2 + $0x20] sm:$0xff]
  %v52 = vld [vmem:[%s2 + $0x28] sm:$0xff]
  %v53 = vld [vmem:[%s2 + $0x30] sm:$0xff]
  %v54 = vld [vmem:[%s2 + $0x38] sm:$0xff]
  %v55 = vld [vmem:[%s2 + $0x40] sm:$0xff]
  %v56 = vld [vmem:[%s2 + $0x48] sm:$0xff]
  %v57 = vld [vmem:[%s2 + $0x50] sm:$0xff]
  %v58 = vld [vmem:[%s2 + $0x58] sm:$0xff]
  %v59 = vld [vmem:[%s2 + $0x60] sm:$0xff]
  %v60 = vld [vmem:[%s2 + $0x68] sm:$0xff]
  %v61 = vld [vmem:[%s2 + $0x70] sm:$0xff]
  %v62 = vld [vmem:[%s2 + $0x78] sm:$0xff]
  %64 = vset.pattern.permute.xlu0 0
  %65 = vperm.xlu0 %64, %v47
  %v66 = vpop.permute.xlu0 %65
  %69 = vset.pattern.permute.xlu0 0
  %70 = vperm.xlu0 %69, %v48
  %v71 = vpop.permute.xlu0 %70
  %74 = vset.pattern.permute.xlu0 0
  %75 = vperm.xlu0 %74, %v49
  %v76 = vpop.permute.xlu0 %75
  %79 = vset.pattern.permute.xlu0 0
  %80 = vperm.xlu0 %79, %v50
  %v81 = vpop.permute.xlu0 %80
  %84 = vset.pattern.permute.xlu0 0
  %85 = vperm.xlu0 %84, %v51
  %v86 = vpop.permute.xlu0 %85
  %89 = vset.pattern.permute.xlu0 0
  %90 = vperm.xlu0 %89, %v52
  %v91 = vpop.permute.xlu0 %90
  %94 = vset.pattern.permute.xlu0 0
  %95 = vperm.xlu0 %94, %v53
  %v96 = vpop.permute.xlu0 %95
  %99 = vset.pattern.permute.xlu0 0
  %100 = vperm.xlu0 %99, %v54
  %v101 = vpop.permute.xlu0 %100
  %104 = vset.pattern.permute.xlu0 0
  %105 = vperm.xlu0 %104, %v55
  %v106 = vpop.permute.xlu0 %105
  %109 = vset.pattern.permute.xlu0 0
  %110 = vperm.xlu0 %109, %v56
  %v111 = vpop.permute.xlu0 %110
  %114 = vset.pattern.permute.xlu0 0
  %115 = vperm.xlu0 %114, %v57
  %v116 = vpop.permute.xlu0 %115
  %119 = vset.pattern.permute.xlu0 0
  %120 = vperm.xlu0 %119, %v58
  %v121 = vpop.permute.xlu0 %120
  %124 = vset.pattern.permute.xlu0 0
  %125 = vperm.xlu0 %124, %v59
  %v126 = vpop.permute.xlu0 %125
  %129 = vset.pattern.permute.xlu0 0
  %130 = vperm.xlu0 %129, %v60
  %v131 = vpop.permute.xlu0 %130
  %134 = vset.pattern.permute.xlu0 0
  %135 = vperm.xlu0 %134, %v61
  %v136 = vpop.permute.xlu0 %135
  %139 = vset.pattern.permute.xlu0 0
  %140 = vperm.xlu0 %139, %v62
  %v141 = vpop.permute.xlu0 %140
  %v159 = vunpack.c.l.b16 %v15
  %v160 = vunpack.c.l.b16 %v16
  %v161 = vunpack.c.l.b16 %v17
  %v162 = vunpack.c.l.b16 %v18
  %v163 = vunpack.c.l.b16 %v19
  %v164 = vunpack.c.l.b16 %v20
  %v165 = vunpack.c.l.b16 %v21
  %v166 = vunpack.c.l.b16 %v22
  %v167 = vunpack.c.l.b16 %v23
  %v168 = vunpack.c.l.b16 %v24
  %v169 = vunpack.c.l.b16 %v25
  %v170 = vunpack.c.l.b16 %v26
  %v171 = vunpack.c.l.b16 %v27
  %v172 = vunpack.c.l.b16 %v28
  %v173 = vunpack.c.l.b16 %v29
  %v174 = vunpack.c.l.b16 %v30
  %v175 = vpack.c.b16 %v160, %v159
  %v176 = vpack.c.b16 %v162, %v161
  %v177 = vpack.c.b16 %v164, %v163
  %v178 = vpack.c.b16 %v166, %v165
  %v179 = vpack.c.b16 %v168, %v167
  %v180 = vpack.c.b16 %v170, %v169
  %v181 = vpack.c.b16 %v172, %v171
  %v182 = vpack.c.b16 %v174, %v173
  %v207 = vunpack.c.l.b16 %v31
  %v208 = vunpack.c.l.b16 %v32
  %v209 = vunpack.c.l.b16 %v33
  %v210 = vunpack.c.l.b16 %v34
  %v211 = vunpack.c.l.b16 %v35
  %v212 = vunpack.c.l.b16 %v36
  %v213 = vunpack.c.l.b16 %v37
  %v214 = vunpack.c.l.b16 %v38
  %v215 = vunpack.c.l.b16 %v39
  %v216 = vunpack.c.l.b16 %v40
  %v217 = vunpack.c.l.b16 %v41
  %v218 = vunpack.c.l.b16 %v42
  %v219 = vunpack.c.l.b16 %v43
  %v220 = vunpack.c.l.b16 %v44
  %v221 = vunpack.c.l.b16 %v45
  %v222 = vunpack.c.l.b16 %v46
  %v223 = vpack.c.b16 %v208, %v207
  %v224 = vpack.c.b16 %v210, %v209
  %v225 = vpack.c.b16 %v212, %v211
  %v226 = vpack.c.b16 %v214, %v213
  %v227 = vpack.c.b16 %v216, %v215
  %v228 = vpack.c.b16 %v218, %v217
  %v229 = vpack.c.b16 %v220, %v219
  %v230 = vpack.c.b16 %v222, %v221
  %239 = vmatprep.subr.bf16.mxu0 0
  %240 = vmatpush1.bf16.msra.mxu0 %v230
  %241 = vmatprep.subr.bf16.mxu0 0
  %242 = vmatpush1.bf16.msra.mxu0 %v229
  %243 = vmatprep.subr.bf16.mxu0 0
  %244 = vmatpush1.bf16.msra.mxu0 %v228
  %245 = vmatprep.subr.bf16.mxu0 0
  %246 = vmatpush1.bf16.msra.mxu0 %v227
  %247 = vmatprep.subr.bf16.mxu0 0
  %248 = vmatpush1.bf16.msra.mxu0 %v226
  %249 = vmatprep.subr.bf16.mxu0 0
  %250 = vmatpush1.bf16.msra.mxu0 %v225
  %251 = vmatprep.subr.bf16.mxu0 0
  %252 = vmatpush1.bf16.msra.mxu0 %v224
  %253 = vmatprep.subr.bf16.mxu0 0
  %254 = vmatpush1.bf16.msra.mxu0 %v223
  %255 = vmatprep.subr.bf16.mxu0 0
  %256 = vmatpush2.bf16.msra.mxu0 0
  %257 = vmatprep.subr.bf16.mxu0 0
  %258 = vmatpush2.bf16.msra.mxu0 0
  %259 = vmatprep.subr.bf16.mxu0 0
  %260 = vmatpush2.bf16.msra.mxu0 0
  %261 = vmatprep.subr.bf16.mxu0 0
  %262 = vmatpush2.bf16.msra.mxu0 0
  %263 = vmatprep.subr.bf16.mxu0 0
  %264 = vmatpush2.bf16.msra.mxu0 0
  %265 = vmatprep.subr.bf16.mxu0 0
  %266 = vmatpush2.bf16.msra.mxu0 0
  %267 = vmatprep.subr.bf16.mxu0 0
  %268 = vmatpush2.bf16.msra.mxu0 0
  %269 = vmatprep.subr.bf16.mxu0 0
  %270 = vmatpush2.bf16.msra.mxu0 0
  %271 = vmatprep.mubr.bf16.mxu0 0
  %272 = vmatmul.mubr.bf16.gmra.mxu0 %v175
  %v273 = vpop.f32.mrf.mxu0
  %v274 = vadd.f32 %v66, %v273
  %v275 = vpop.f32.mrf.mxu0
  %v276 = vpop.f32.mrf.mxu0
  %v277 = vadd.f32 %v71, %v276
  %v278 = vpop.f32.mrf.mxu0
  %279 = vmatprep.mubr.bf16.mxu0 0
  %280 = vmatmul.mubr.bf16.gmra.mxu0 %v176
  %v281 = vpop.f32.mrf.mxu0
  %v282 = vadd.f32 %v76, %v281
  %v283 = vpop.f32.mrf.mxu0
  %v284 = vpop.f32.mrf.mxu0
  %v285 = vadd.f32 %v81, %v284
  %v286 = vpop.f32.mrf.mxu0
  %287 = vmatprep.mubr.bf16.mxu0 0
  %288 = vmatmul.mubr.bf16.gmra.mxu0 %v177
  %v289 = vpop.f32.mrf.mxu0
  %v290 = vadd.f32 %v86, %v289
  %v291 = vpop.f32.mrf.mxu0
  %v292 = vpop.f32.mrf.mxu0
  %v293 = vadd.f32 %v91, %v292
  %v294 = vpop.f32.mrf.mxu0
  %295 = vmatprep.mubr.bf16.mxu0 0
  %296 = vmatmul.mubr.bf16.gmra.mxu0 %v178
  %v297 = vpop.f32.mrf.mxu0
  %v298 = vadd.f32 %v96, %v297
  %v299 = vpop.f32.mrf.mxu0
  %v300 = vpop.f32.mrf.mxu0
  %v301 = vadd.f32 %v101, %v300
  %v302 = vpop.f32.mrf.mxu0
  %303 = vmatprep.mubr.bf16.mxu0 0
  %304 = vmatmul.mubr.bf16.gmra.mxu0 %v179
  %v305 = vpop.f32.mrf.mxu0
  %v306 = vadd.f32 %v106, %v305
  %v307 = vpop.f32.mrf.mxu0
  %v308 = vpop.f32.mrf.mxu0
  %v309 = vadd.f32 %v111, %v308
  %v310 = vpop.f32.mrf.mxu0
  %311 = vmatprep.mubr.bf16.mxu0 0
  %312 = vmatmul.mubr.bf16.gmra.mxu0 %v180
  %v313 = vpop.f32.mrf.mxu0
  %v314 = vadd.f32 %v116, %v313
  %v315 = vpop.f32.mrf.mxu0
  %v316 = vpop.f32.mrf.mxu0
  %v317 = vadd.f32 %v121, %v316
  %v318 = vpop.f32.mrf.mxu0
  %319 = vmatprep.mubr.bf16.mxu0 0
  %320 = vmatmul.mubr.bf16.gmra.mxu0 %v181
  %v321 = vpop.f32.mrf.mxu0
  %v322 = vadd.f32 %v126, %v321
  %v323 = vpop.f32.mrf.mxu0
  %v324 = vpop.f32.mrf.mxu0
  %v325 = vadd.f32 %v131, %v324
  %v326 = vpop.f32.mrf.mxu0
  %327 = vmatprep.mubr.bf16.mxu0 0
  %328 = vmatmul.mubr.bf16.gmra.mxu0 %v182
  %v329 = vpop.f32.mrf.mxu0
  %v330 = vadd.f32 %v136, %v329
  %v331 = vpop.f32.mrf.mxu0
  %v332 = vpop.f32.mrf.mxu0
  %v333 = vadd.f32 %v141, %v332
  %v334 = vpop.f32.mrf.mxu0
  %335 = vdwg.mxu0
  %v336 = vmax.f32 %v274, 0.0
  %v337 = vmax.f32 %v277, 0.0
  %v338 = vmax.f32 %v282, 0.0
  %v339 = vmax.f32 %v285, 0.0
  %v340 = vmax.f32 %v290, 0.0
  %v341 = vmax.f32 %v293, 0.0
  %v342 = vmax.f32 %v298, 0.0
  %v343 = vmax.f32 %v301, 0.0
  %v344 = vmax.f32 %v306, 0.0
  %v345 = vmax.f32 %v309, 0.0
  %v346 = vmax.f32 %v314, 0.0
  %v347 = vmax.f32 %v317, 0.0
  %v348 = vmax.f32 %v322, 0.0
  %v349 = vmax.f32 %v325, 0.0
  %v350 = vmax.f32 %v330, 0.0
  %v351 = vmax.f32 %v333, 0.0
  %v352 = vpack.c.bf16 %v337, %v336
  %v353 = vpack.c.bf16 %v339, %v338
  %v354 = vpack.c.bf16 %v341, %v340
  %v355 = vpack.c.bf16 %v343, %v342
  %v356 = vpack.c.bf16 %v345, %v344
  %v357 = vpack.c.bf16 %v347, %v346
  %v358 = vpack.c.bf16 %v349, %v348
  %v359 = vpack.c.bf16 %v351, %v350
  %v368 = vunpack.c.l.b16 %v352
  %v369 = vunpack.c.h.b16 %v352
  %v370 = vunpack.c.l.b16 %v353
  %v371 = vunpack.c.h.b16 %v353
  %v372 = vunpack.c.l.b16 %v354
  %v373 = vunpack.c.h.b16 %v354
  %v374 = vunpack.c.l.b16 %v355
  %v375 = vunpack.c.h.b16 %v355
  %v376 = vunpack.c.l.b16 %v356
  %v377 = vunpack.c.h.b16 %v356
  %v378 = vunpack.c.l.b16 %v357
  %v379 = vunpack.c.h.b16 %v357
  %v380 = vunpack.c.l.b16 %v358
  %v381 = vunpack.c.h.b16 %v358
  %v382 = vunpack.c.l.b16 %v359
  %v383 = vunpack.c.h.b16 %v359
  %v384 = vpack.c.b16 %v368, %v368
  %v385 = vpack.c.b16 %v369, %v369
  %v386 = vpack.c.b16 %v370, %v370
  %v387 = vpack.c.b16 %v371, %v371
  %v388 = vpack.c.b16 %v372, %v372
  %v389 = vpack.c.b16 %v373, %v373
  %v390 = vpack.c.b16 %v374, %v374
  %v391 = vpack.c.b16 %v375, %v375
  %v392 = vpack.c.b16 %v376, %v376
  %v393 = vpack.c.b16 %v377, %v377
  %v394 = vpack.c.b16 %v378, %v378
  %v395 = vpack.c.b16 %v379, %v379
  %v396 = vpack.c.b16 %v380, %v380
  %v397 = vpack.c.b16 %v381, %v381
  %v398 = vpack.c.b16 %v382, %v382
  %v399 = vpack.c.b16 %v383, %v383
  %416 = vst [vmem:[%s3] sm:$0xf] %v384
  %417 = vst [vmem:[%s3 + $0x4] sm:$0xf] %v385
  %418 = vst [vmem:[%s3 + $0x8] sm:$0xf] %v386
  %419 = vst [vmem:[%s3 + $0xc] sm:$0xf] %v387
  %420 = vst [vmem:[%s3 + $0x10] sm:$0xf] %v388
  %421 = vst [vmem:[%s3 + $0x14] sm:$0xf] %v389
  %422 = vst [vmem:[%s3 + $0x18] sm:$0xf] %v390
  %423 = vst [vmem:[%s3 + $0x1c] sm:$0xf] %v391
  %424 = vst [vmem:[%s3 + $0x20] sm:$0xf] %v392
  %425 = vst [vmem:[%s3 + $0x24] sm:$0xf] %v393
  %426 = vst [vmem:[%s3 + $0x28] sm:$0xf] %v394
  %427 = vst [vmem:[%s3 + $0x2c] sm:$0xf] %v395
  %428 = vst [vmem:[%s3 + $0x30] sm:$0xf] %v396
  %429 = vst [vmem:[%s3 + $0x34] sm:$0xf] %v397
  %430 = vst [vmem:[%s3 + $0x38] sm:$0xf] %v398
  %431 = vst [vmem:[%s3 + $0x3c] sm:$0xf] %v399
  // Predicated region
  $region14: #{mhgnimc_forward.4} parent=0 // pred_check
    _
  $region15: #{mhgnimc_forward.4} parent=0 // pred_check_branch
    %433 = sbr.rel (0) target = $region17
  $region16: #{mhgnimc_forward.4} parent=0 // pred_region
    _
  $region17: #{mhgnimc_forward.4} parent=0 // pred_fallthru
    _
  // Predicated region
  $region18: #{mhgnimc_forward.4} parent=0 // pred_check
    _
  $region19: #{mhgnimc_forward.4} parent=0 // pred_check_branch
    %435 = sbr.rel (0) target = $region21
  $region20: #{mhgnimc_forward.4} parent=0 // pred_region
    _
  $region21: #{mhgnimc_forward.4} parent=0 // pred_fallthru
    _

</llo_original>
